<compile_context>
chip_gen: v5e
topology: v5e:2x2
jax: 0.10.0
libtpu: 0.0.40
codegen_flags: <defaults>
</compile_context>

<pallas_src>
import functools
from collections import namedtuple

import jax
import jax.numpy as jnp
import numpy as np
from jax.experimental import pallas as pl
from jax.experimental.pallas import tpu as pltpu

PixAccIoUMetricT = namedtuple("PixAccIoUMetricT", ["IoU", "pixAcc"])

# Conservative VMEM budget for the streamed blocks + scratch accumulators.
# Fits the v5e default scoped-VMEM limit (16 MiB); leaves headroom on v6e/v7x.
_VMEM_BUDGET_BYTES = 10 * 1024 * 1024


# --------------------------------------------------------------------------
# Pallas kernel: per-image argmax over classes + per-class confusion counts,
# accumulated over spatial tiles.
# --------------------------------------------------------------------------
def _counts_kernel(logits_ref, tgt_ref, cnt_ref, tp_acc, po_acc, pt_acc,
                   *, threshold, ignore_index, hw, tile_hw, needs_mask):
    s = pl.program_id(1)                       # spatial-tile index (reduction axis)

    @pl.when(s == 0)
    def _init():
        tp_acc[...] = jnp.zeros_like(tp_acc)
        po_acc[...] = jnp.zeros_like(po_acc)
        pt_acc[...] = jnp.zeros_like(pt_acc)

    x = logits_ref[0]                          # (C, T) model output tile (native dtype)
    t = tgt_ref[0]                             # (C, T) target tile
    C, T = x.shape

    cls = jax.lax.broadcasted_iota(jnp.int32, (C, T), 0)

    # predicted class = argmax over classes of (x > thr).  The thresholded map
    # is binary, so the argmax is just "first class above threshold", or 0 if
    # none is (matches torch.argmax of an all-zero row).  No explicit max.
    out_idx = jnp.min(jnp.where(x > threshold, cls, C), axis=0, keepdims=True)
    out_idx = jnp.where(out_idx == C, 0, out_idx)                      # (1, T)

    # target argmax: first occurrence of the maximum along the class axis.
    t_max = jnp.max(t, axis=0, keepdims=True)                          # (1, T)
    tgt_idx = jnp.min(jnp.where(t == t_max, cls, C), axis=0, keepdims=True)

    if ignore_index is not None:
        # Ignored pixels get index -1 (match no class) -> they drop out of
        # tp/fp/fn and land in tn via hw - (tp+fp+fn), exactly like the torch
        # reference (histc ignores -1; tn = H*W - (tp+fp+fn)).
        ign = tgt_idx == ignore_index
        out_idx = jnp.where(ign, -1, out_idx)
        tgt_idx = jnp.where(ign, -1, tgt_idx)

    eq_out = out_idx == cls                    # (C, T) one-hot of predicted class
    eq_tgt = tgt_idx == cls                    # (C, T) one-hot of target class

    if needs_mask:
        # Exclude lanes past the true spatial extent (padded tail tile).
        lane = jax.lax.broadcasted_iota(jnp.int32, (1, T), 1)
        valid = (s * tile_hw + lane) < hw
        eq_out = jnp.logical_and(eq_out, valid)
        eq_tgt = jnp.logical_and(eq_tgt, valid)

    # Deferred reduction: lane-wise int32 accumulation only (VPU adds); the
    # cross-lane (XLU) sums happen once per image in the finalize branch.
    tp_acc[...] += jnp.logical_and(eq_out, eq_tgt).astype(jnp.int32)
    po_acc[...] += eq_out.astype(jnp.int32)     # histogram of predictions
    pt_acc[...] += eq_tgt.astype(jnp.int32)     # histogram of targets

    @pl.when(s == pl.num_programs(1) - 1)
    def _finalize():
        tp = jnp.sum(tp_acc[...], axis=1, keepdims=True)               # (C, 1)
        po = jnp.sum(po_acc[...], axis=1, keepdims=True)
        pt = jnp.sum(pt_acc[...], axis=1, keepdims=True)
        fp = po - tp
        fn = pt - tp
        tn = hw - (tp + fp + fn)
        # Pack tp/fp/fn/tn into a single (C, 4) slab -> one output write per
        # image instead of four 1-lane outputs.
        lane4 = jax.lax.broadcasted_iota(jnp.int32, (C, 4), 1)
        slab = jnp.where(lane4 == 0, tp,
               jnp.where(lane4 == 1, fp,
               jnp.where(lane4 == 2, fn, tn)))
        cnt_ref[0] = slab


def _choose_tile_hw(hw, c, itemsize):
    """Biggest spatial tile (multiple of 128 lanes) that fits the VMEM budget:
    2 inputs x 2 pipeline buffers (streamed) + 3 int32 (C, T) accumulators."""
    per_lane = 2 * 2 * c * itemsize + 3 * c * 4
    tile = _VMEM_BUDGET_BYTES // per_lane
    tile = max(512, (tile // 128) * 128)
    hw_lanes = ((hw + 127) // 128) * 128
    return min(tile, hw_lanes)


def _pallas_counts(output, target, *, threshold, ignore_index, tile_hw=None):
    output = jnp.asarray(output)
    target = jnp.asarray(target)
    B, C, H, W = output.shape
    HW = H * W

    # Keep the native dtype (bf16 halves HBM traffic for bf16 models).
    out_flat = output.reshape(B, C, HW)
    tgt_flat = target.reshape(B, C, HW)

    itemsize = max(out_flat.dtype.itemsize, tgt_flat.dtype.itemsize)
    if tile_hw is None:
        tile = _choose_tile_hw(HW, C, itemsize)
    else:
        tile = max(128, (int(tile_hw) // 128) * 128)
        tile = min(tile, ((HW + 127) // 128) * 128)

    num_tiles = pl.cdiv(HW, tile)
    hw_pad = num_tiles * tile
    if hw_pad != HW:
        pad = hw_pad - HW
        out_flat = jnp.pad(out_flat, ((0, 0), (0, 0), (0, pad)))
        tgt_flat = jnp.pad(tgt_flat, ((0, 0), (0, 0), (0, pad)))

    kernel = functools.partial(
        _counts_kernel,
        threshold=float(threshold),
        ignore_index=ignore_index,
        hw=HW,
        tile_hw=tile,
        needs_mask=(hw_pad != HW),
    )

    in_spec = pl.BlockSpec((1, C, tile), lambda b, s: (b, 0, s))
    out_spec = pl.BlockSpec((1, C, 4), lambda b, s: (b, 0, 0))

    bytes_accessed = 2 * B * C * hw_pad * itemsize + B * C * 4 * 4
    cost = pl.CostEstimate(flops=12 * B * C * hw_pad, transcendentals=0,
                           bytes_accessed=bytes_accessed)

    counts = pl.pallas_call(
        kernel,
        out_shape=jax.ShapeDtypeStruct((B, C, 4), jnp.int32),
        grid_spec=pltpu.PrefetchScalarGridSpec(
            num_scalar_prefetch=0,
            grid=(B, num_tiles),
            in_specs=[in_spec, in_spec],
            out_specs=out_spec,
            scratch_shapes=[pltpu.VMEM((C, tile), jnp.int32)] * 3,
        ),
        compiler_params=pltpu.CompilerParams(
            dimension_semantics=("parallel", "arbitrary")),
        cost_estimate=cost,
    )(out_flat, tgt_flat)

    tp = counts[:, :, 0]
    fp = counts[:, :, 1]
    fn = counts[:, :, 2]
    tn = counts[:, :, 3]
    return tp, fp, fn, tn


# --------------------------------------------------------------------------
# Plain-JAX glue mirroring the torch reduction helpers (tiny scalar math).
# --------------------------------------------------------------------------
def _handle_zero_division(x):
    return jnp.where(jnp.isnan(x), jnp.zeros_like(x), x)


def _iou_score(tp, fp, fn):
    return tp / (tp + fp + fn)


def _compute_iou_metric(tp, fp, fn, reduction=None, class_weights=None):
    if class_weights is None and reduction is not None and "weighted" in reduction:
        raise ValueError(f"Class weights should be provided for `{reduction}` reduction.")
    cw = class_weights if class_weights is not None else 1.0
    cw = jnp.asarray(cw, dtype=jnp.float32)
    cw = cw / cw.sum()
    if reduction == "micro":
        return _iou_score(tp.sum(), fp.sum(), fn.sum())
    elif reduction == "macro":
        s = _handle_zero_division(_iou_score(tp.sum(0), fp.sum(0), fn.sum(0)))
        return (s * cw).mean()
    elif reduction == "weighted":
        s = _handle_zero_division(_iou_score(tp.sum(0), fp.sum(0), fn.sum(0)))
        return (s * cw).sum()
    elif reduction == "micro-imagewise":
        s = _handle_zero_division(_iou_score(tp.sum(1), fp.sum(1), fn.sum(1)))
        return s.mean()
    elif reduction in {"macro-imagewise", "weighted-imagewise"}:
        s = _iou_score(tp, fp, fn)
        return (s.mean(0) * cw).mean()
    elif reduction == "none" or reduction is None:
        return _iou_score(tp, fp, fn)
    else:
        raise ValueError(
            "`reduction` should be in [micro, macro, weighted, micro-imagewise, "
            "macro-imagesize, weighted-imagewise, none, None]")


def _compute_pix_acc_metric(tp, tn, height, width):
    if height * width == 0:
        return jnp.float32(0.0)
    batch_size, cls_num = tp.shape
    return (tp.sum() + tn.sum()) / (batch_size * cls_num * height * width)


# --------------------------------------------------------------------------
# Module equivalent.
# --------------------------------------------------------------------------
class PixAccIoUMetric:
    def __init__(self, classes_num, ignore_index=None, reduction=None,
                 class_weights=None, threshold_value=0.5):
        self.cls_num = classes_num
        self.ignore_index = ignore_index
        self.reduction = reduction
        self.class_weights = class_weights
        self.threshold_value = threshold_value

    def __call__(self, output, target):
        B, C, H, W = output.shape
        assert C == self.cls_num
        tp, fp, fn, tn = _pallas_counts(
            output, target,
            threshold=self.threshold_value,
            ignore_index=self.ignore_index)
        iou = _compute_iou_metric(tp, fp, fn, self.reduction, self.class_weights)
        pix = _compute_pix_acc_metric(tp, tn, H, W)
        return PixAccIoUMetricT(iou, pix)


# --------------------------------------------------------------------------
# Pure-JAX reference (for correctness checks).
# --------------------------------------------------------------------------
def _reference_counts(output, target, cls_num, thr, ignore_index=None):
    pred = (output > thr).astype(jnp.float32)
    oi = jnp.argmax(pred, axis=1)
    ti = jnp.argmax(target, axis=1)
    if ignore_index is not None:
        ign = ti == ignore_index
        oi = jnp.where(ign, -1, oi)
        ti = jnp.where(ign, -1, ti)
    B, H, W = oi.shape
    oi = oi.reshape(B, -1)
    ti = ti.reshape(B, -1)
    cls = jnp.arange(cls_num)
    oc = oi[:, None, :] == cls[None, :, None]
    tc = ti[:, None, :] == cls[None, :, None]
    tp = jnp.sum(oc & tc, axis=-1).astype(jnp.int32)
    fp = (jnp.sum(oc, axis=-1) - tp).astype(jnp.int32)
    fn = (jnp.sum(tc, axis=-1) - tp).astype(jnp.int32)
    tn = (H * W - (tp + fp + fn)).astype(jnp.int32)
    return tp, fp, fn, tn


if __name__ == "__main__":
    key = jax.random.PRNGKey(0)
    k1, k2, k3, k4 = jax.random.split(key, 4)

    # --- Test 1: metric end-to-end (small image, single spatial tile). ---
    B, C, H, W = 2, 4, 16, 16
    output = jax.random.uniform(k1, (B, C, H, W), dtype=jnp.float32)
    target = jax.random.uniform(k2, (B, C, H, W), dtype=jnp.float32)

    metric = PixAccIoUMetric(classes_num=C, reduction=None, threshold_value=0.5)
    iou, pix_acc = metric(output, target)
    jax.block_until_ready(iou)
    jax.block_until_ready(pix_acc)

    rtp, rfp, rfn, rtn = _reference_counts(output, target, C, 0.5)
    ref_iou = rtp / (rtp + rfp + rfn)
    ref_pix = (rtp.sum() + rtn.sum()) / (B * C * H * W)
    assert np.allclose(np.asarray(iou), np.asarray(ref_iou),
                       atol=1e-6, equal_nan=True), "IoU mismatch"
    assert np.allclose(np.asarray(pix_acc), np.asarray(ref_pix),
                       atol=1e-6), "pixAcc mismatch"

    # --- Test 2: multi-tile spatial accumulation, ragged tail mask, ignore_index. ---
    B2, C2, H2, W2 = 2, 3, 10, 30        # HW = 300 -> 3 tiles of 128, tail masked
    out2 = jax.random.uniform(k3, (B2, C2, H2, W2), dtype=jnp.float32)
    tgt2 = jax.random.uniform(k4, (B2, C2, H2, W2), dtype=jnp.float32)
    tp2, fp2, fn2, tn2 = _pallas_counts(out2, tgt2, threshold=0.4,
                                        ignore_index=1, tile_hw=128)
    jax.block_until_ready(tp2)
    etp, efp, efn, etn = _reference_counts(out2, tgt2, C2, 0.4, ignore_index=1)
    for got, exp in ((tp2, etp), (fp2, efp), (fn2, efn), (tn2, etn)):
        assert np.array_equal(np.asarray(got), np.asarray(exp)), "count mismatch"

    print("KERNEL_OK")
</pallas_src>

<mosaic_0001>
module attributes {stable_mosaic.version = 11 : i64} {
  func.func @_counts_kernel(%arg0: i32, %arg1: i32, %arg2: memref<1x4x256xf32, #tpu.memory_space<vmem>>, %arg3: memref<1x4x256xf32, #tpu.memory_space<vmem>>, %arg4: memref<1x4x4xi32, #tpu.memory_space<vmem>>, %arg5: memref<4x256xi32, #tpu.memory_space<vmem>>, %arg6: memref<4x256xi32, #tpu.memory_space<vmem>>, %arg7: memref<4x256xi32, #tpu.memory_space<vmem>>) attributes {dimension_semantics = [#tpu.dimension_semantics<parallel>, #tpu.dimension_semantics<arbitrary>], iteration_bounds = array<i64: 2, 1>, scalar_prefetch = 0 : i64, scratch_operands = 3 : i64, tpu.core_type = #tpu.core_type<tc>, window_params = [{transform_indices = @transform_0, window_bounds = array<i64: 1, 4, 256>}, {transform_indices = @transform_1, window_bounds = array<i64: 1, 4, 256>}, {transform_indices = @transform_2, window_bounds = array<i64: 1, 4, 4>}]} {
    %c0_i32 = arith.constant 0 : i32
    %0 = arith.cmpi eq, %arg1, %c0_i32 : i32
    %1 = arith.extui %0 : i1 to i32
    %c0_i32_0 = arith.constant 0 : i32
    %2 = arith.cmpi ne, %1, %c0_i32_0 : i32
    scf.if %2 {
      %c0_i32_26 = arith.constant 0 : i32
      %46 = vector.broadcast %c0_i32_26 : i32 to vector<4x256xi32>
      %c0_27 = arith.constant 0 : index
      %c0_28 = arith.constant 0 : index
      %47 = vector.load %arg5[%c0_27, %c0_28] : memref<4x256xi32, #tpu.memory_space<vmem>>, vector<4x256xi32>
      tpu.vector_store %arg5[%c0_27, %c0_28], %46 {strides = array<i32>} : memref<4x256xi32, #tpu.memory_space<vmem>>, vector<4x256xi32>,
      %c0_i32_29 = arith.constant 0 : i32
      %48 = vector.broadcast %c0_i32_29 : i32 to vector<4x256xi32>
      %c0_30 = arith.constant 0 : index
      %c0_31 = arith.constant 0 : index
      %49 = vector.load %arg6[%c0_30, %c0_31] : memref<4x256xi32, #tpu.memory_space<vmem>>, vector<4x256xi32>
      tpu.vector_store %arg6[%c0_30, %c0_31], %48 {strides = array<i32>} : memref<4x256xi32, #tpu.memory_space<vmem>>, vector<4x256xi32>,
      %c0_i32_32 = arith.constant 0 : i32
      %50 = vector.broadcast %c0_i32_32 : i32 to vector<4x256xi32>
      %c0_33 = arith.constant 0 : index
      %c0_34 = arith.constant 0 : index
      %51 = vector.load %arg7[%c0_33, %c0_34] : memref<4x256xi32, #tpu.memory_space<vmem>>, vector<4x256xi32>
      tpu.vector_store %arg7[%c0_33, %c0_34], %50 {strides = array<i32>} : memref<4x256xi32, #tpu.memory_space<vmem>>, vector<4x256xi32>,
    } else {
    }
    %c0 = arith.constant 0 : index
    %c0_1 = arith.constant 0 : index
    %c0_2 = arith.constant 0 : index
    %3 = vector.load %arg2[%c0, %c0_1, %c0_2] : memref<1x4x256xf32, #tpu.memory_space<vmem>>, vector<1x4x256xf32>
    %4 = vector.shape_cast %3 : vector<1x4x256xf32> to vector<4x256xf32>
    %c0_3 = arith.constant 0 : index
    %c0_4 = arith.constant 0 : index
    %c0_5 = arith.constant 0 : index
    %5 = vector.load %arg3[%c0_3, %c0_4, %c0_5] : memref<1x4x256xf32, #tpu.memory_space<vmem>>, vector<1x4x256xf32>
    %6 = vector.shape_cast %5 : vector<1x4x256xf32> to vector<4x256xf32>
    %7 = tpu.iota {dimensions = array<i32: 0>} : vector<4x256xi32>
    %cst = arith.constant 5.000000e-01 : f32
    %8 = vector.broadcast %cst : f32 to vector<4x256xf32>
    %9 = arith.cmpf ogt, %4, %8 : vector<4x256xf32>
    %c4_i32 = arith.constant 4 : i32
    %10 = vector.broadcast %c4_i32 : i32 to vector<4x256xi32>
    %11 = arith.select %9, %7, %10 : vector<4x256xi1>, vector<4x256xi32>
    %cst_6 = arith.constant dense<2147483647> : vector<256xi32>
    %12 = vector.multi_reduction <minsi>, %11, %cst_6 [0] : vector<4x256xi32> to vector<256xi32>
    %13 = vector.shape_cast %12 : vector<256xi32> to vector<1x256xi32>
    %c4_i32_7 = arith.constant 4 : i32
    %14 = vector.broadcast %c4_i32_7 : i32 to vector<1x256xi32>
    %15 = arith.cmpi eq, %13, %14 : vector<1x256xi32>
    %c0_i32_8 = arith.constant 0 : i32
    %16 = vector.broadcast %c0_i32_8 : i32 to vector<1x256xi32>
    %17 = arith.select %15, %16, %13 : vector<1x256xi1>, vector<1x256xi32>
    %cst_9 = arith.constant dense<0xFF800000> : vector<256xf32>
    %18 = vector.multi_reduction <maximumf>, %6, %cst_9 [0] : vector<4x256xf32> to vector<256xf32>
    %19 = vector.shape_cast %18 : vector<256xf32> to vector<1x256xf32>
    %20 = vector.broadcast %19 : vector<1x256xf32> to vector<4x256xf32>
    %21 = arith.cmpf oeq, %6, %20 : vector<4x256xf32>
    %c4_i32_10 = arith.constant 4 : i32
    %22 = vector.broadcast %c4_i32_10 : i32 to vector<4x256xi32>
    %23 = arith.select %21, %7, %22 : vector<4x256xi1>, vector<4x256xi32>
    %cst_11 = arith.constant dense<2147483647> : vector<256xi32>
    %24 = vector.multi_reduction <minsi>, %23, %cst_11 [0] : vector<4x256xi32> to vector<256xi32>
    %25 = vector.shape_cast %24 : vector<256xi32> to vector<1x256xi32>
    %26 = vector.broadcast %17 : vector<1x256xi32> to vector<4x256xi32>
    %27 = arith.cmpi eq, %26, %7 : vector<4x256xi32>
    %28 = vector.broadcast %25 : vector<1x256xi32> to vector<4x256xi32>
    %29 = arith.cmpi eq, %28, %7 : vector<4x256xi32>
    %c0_12 = arith.constant 0 : index
    %c0_13 = arith.constant 0 : index
    %30 = vector.load %arg5[%c0_12, %c0_13] : memref<4x256xi32, #tpu.memory_space<vmem>>, vector<4x256xi32>
    %31 = arith.andi %27, %29 : vector<4x256xi1>
    %32 = arith.extui %31 : vector<4x256xi1> to vector<4x256xi32>
    %33 = arith.addi %30, %32 : vector<4x256xi32>
    %c0_14 = arith.constant 0 : index
    %c0_15 = arith.constant 0 : index
    %34 = vector.load %arg5[%c0_14, %c0_15] : memref<4x256xi32, #tpu.memory_space<vmem>>, vector<4x256xi32>
    tpu.vector_store %arg5[%c0_14, %c0_15], %33 {strides = array<i32>} : memref<4x256xi32, #tpu.memory_space<vmem>>, vector<4x256xi32>,
    %c0_16 = arith.constant 0 : index
    %c0_17 = arith.constant 0 : index
    %35 = vector.load %arg6[%c0_16, %c0_17] : memref<4x256xi32, #tpu.memory_space<vmem>>, vector<4x256xi32>
    %36 = arith.extui %27 : vector<4x256xi1> to vector<4x256xi32>
    %37 = arith.addi %35, %36 : vector<4x256xi32>
    %c0_18 = arith.constant 0 : index
    %c0_19 = arith.constant 0 : index
    %38 = vector.load %arg6[%c0_18, %c0_19] : memref<4x256xi32, #tpu.memory_space<vmem>>, vector<4x256xi32>
    tpu.vector_store %arg6[%c0_18, %c0_19], %37 {strides = array<i32>} : memref<4x256xi32, #tpu.memory_space<vmem>>, vector<4x256xi32>,
    %c0_20 = arith.constant 0 : index
    %c0_21 = arith.constant 0 : index
    %39 = vector.load %arg7[%c0_20, %c0_21] : memref<4x256xi32, #tpu.memory_space<vmem>>, vector<4x256xi32>
    %40 = arith.extui %29 : vector<4x256xi1> to vector<4x256xi32>
    %41 = arith.addi %39, %40 : vector<4x256xi32>
    %c0_22 = arith.constant 0 : index
    %c0_23 = arith.constant 0 : index
    %42 = vector.load %arg7[%c0_22, %c0_23] : memref<4x256xi32, #tpu.memory_space<vmem>>, vector<4x256xi32>
    tpu.vector_store %arg7[%c0_22, %c0_23], %41 {strides = array<i32>} : memref<4x256xi32, #tpu.memory_space<vmem>>, vector<4x256xi32>,
    %c0_i32_24 = arith.constant 0 : i32
    %43 = arith.cmpi eq, %arg1, %c0_i32_24 : i32
    %44 = arith.extui %43 : i1 to i32
    %c0_i32_25 = arith.constant 0 : i32
    %45 = arith.cmpi ne, %44, %c0_i32_25 : i32
    scf.if %45 {
      %c0_26 = arith.constant 0 : index
      %c0_27 = arith.constant 0 : index
      %46 = vector.load %arg5[%c0_26, %c0_27] : memref<4x256xi32, #tpu.memory_space<vmem>>, vector<4x256xi32>
      %cst_28 = arith.constant dense<0> : vector<4xi32>
      %47 = vector.multi_reduction <add>, %46, %cst_28 [1] : vector<4x256xi32> to vector<4xi32>
      %48 = vector.shape_cast %47 : vector<4xi32> to vector<4x1xi32>
      %c0_29 = arith.constant 0 : index
      %c0_30 = arith.constant 0 : index
      %49 = vector.load %arg6[%c0_29, %c0_30] : memref<4x256xi32, #tpu.memory_space<vmem>>, vector<4x256xi32>
      %cst_31 = arith.constant dense<0> : vector<4xi32>
      %50 = vector.multi_reduction <add>, %49, %cst_31 [1] : vector<4x256xi32> to vector<4xi32>
      %51 = vector.shape_cast %50 : vector<4xi32> to vector<4x1xi32>
      %c0_32 = arith.constant 0 : index
      %c0_33 = arith.constant 0 : index
      %52 = vector.load %arg7[%c0_32, %c0_33] : memref<4x256xi32, #tpu.memory_space<vmem>>, vector<4x256xi32>
      %cst_34 = arith.constant dense<0> : vector<4xi32>
      %53 = vector.multi_reduction <add>, %52, %cst_34 [1] : vector<4x256xi32> to vector<4xi32>
      %54 = vector.shape_cast %53 : vector<4xi32> to vector<4x1xi32>
      %55 = arith.subi %51, %48 : vector<4x1xi32>
      %56 = arith.subi %54, %48 : vector<4x1xi32>
      %57 = arith.addi %48, %55 : vector<4x1xi32>
      %58 = arith.addi %57, %56 : vector<4x1xi32>
      %c256_i32 = arith.constant 256 : i32
      %59 = vector.broadcast %c256_i32 : i32 to vector<4x1xi32>
      %60 = arith.subi %59, %58 : vector<4x1xi32>
      %61 = tpu.iota {dimensions = array<i32: 1>} : vector<4x4xi32>
      %c0_i32_35 = arith.constant 0 : i32
      %62 = vector.broadcast %c0_i32_35 : i32 to vector<4x4xi32>
      %63 = arith.cmpi eq, %61, %62 : vector<4x4xi32>
      %c1_i32 = arith.constant 1 : i32
      %64 = vector.broadcast %c1_i32 : i32 to vector<4x4xi32>
      %65 = arith.cmpi eq, %61, %64 : vector<4x4xi32>
      %c2_i32 = arith.constant 2 : i32
      %66 = vector.broadcast %c2_i32 : i32 to vector<4x4xi32>
      %67 = arith.cmpi eq, %61, %66 : vector<4x4xi32>
      %68 = vector.shape_cast %56 : vector<4x1xi32> to vector<4x1xi32>
      %69 = vector.broadcast %68 : vector<4x1xi32> to vector<4x4xi32>
      %70 = vector.shape_cast %60 : vector<4x1xi32> to vector<4x1xi32>
      %71 = vector.broadcast %70 : vector<4x1xi32> to vector<4x4xi32>
      %72 = arith.select %67, %69, %71 : vector<4x4xi1>, vector<4x4xi32>
      %73 = vector.shape_cast %55 : vector<4x1xi32> to vector<4x1xi32>
      %74 = vector.broadcast %73 : vector<4x1xi32> to vector<4x4xi32>
      %75 = arith.select %65, %74, %72 : vector<4x4xi1>, vector<4x4xi32>
      %76 = vector.shape_cast %48 : vector<4x1xi32> to vector<4x1xi32>
      %77 = vector.broadcast %76 : vector<4x1xi32> to vector<4x4xi32>
      %78 = arith.select %63, %77, %75 : vector<4x4xi1>, vector<4x4xi32>
      %c0_36 = arith.constant 0 : index
      %c0_37 = arith.constant 0 : index
      %c0_38 = arith.constant 0 : index
      %79 = vector.load %arg4[%c0_36, %c0_37, %c0_38] : memref<1x4x4xi32, #tpu.memory_space<vmem>>, vector<1x4x4xi32>
      %80 = vector.shape_cast %79 : vector<1x4x4xi32> to vector<4x4xi32>
      %81 = vector.shape_cast %78 : vector<4x4xi32> to vector<1x4x4xi32>
      tpu.vector_store %arg4[%c0_36, %c0_37, %c0_38], %81 {strides = array<i32>} : memref<1x4x4xi32, #tpu.memory_space<vmem>>, vector<1x4x4xi32>,
    } else {
    }
    return
  }
  func.func @transform_0(%arg0: i32, %arg1: i32) -> (i32, i32, i32) {
    %c0_i32 = arith.constant 0 : i32
    %c0_i32_0 = arith.constant 0 : i32
    return %arg0, %c0_i32, %arg1 : i32, i32, i32
  }
  func.func @transform_1(%arg0: i32, %arg1: i32) -> (i32, i32, i32) {
    %c0_i32 = arith.constant 0 : i32
    %c0_i32_0 = arith.constant 0 : i32
    return %arg0, %c0_i32, %arg1 : i32, i32, i32
  }
  func.func @transform_2(%arg0: i32, %arg1: i32) -> (i32, i32, i32) {
    %c0_i32 = arith.constant 0 : i32
    %c0_i32_0 = arith.constant 0 : i32
    %c0_i32_1 = arith.constant 0 : i32
    return %arg0, %c0_i32, %c0_i32_0 : i32, i32, i32
  }
}

</mosaic_0001>

<llo_original>
// kernel: tpu_custom_call.1
$region0: #{tpu_custom_call.1}
  #allocation0 [shape = 'u32[]', space=smem, size = 0x4, offset = 0x4, fixed_abs, tag = 'smem constant byte address 0x4 - core index']
  #allocation1 [shape = 'u32[72,128]{1,0:T(1,128)}', space=vmem, size = 0x9000, scoped, tag = 'internal scratch']
  #allocation2 [shape = 's32[4,256]{1,0:T(4,128)}', space=vmem, size = 0x1000, scoped, tag = 'scratch operand']
  #allocation3 [shape = 's32[4,256]{1,0:T(4,128)}', space=vmem, size = 0x1000, scoped, tag = 'scratch operand']
  #allocation4 [shape = 's32[4,256]{1,0:T(4,128)}', space=vmem, size = 0x1000, scoped, tag = 'scratch operand']
  %s0 = inlined_call_operand.hbm [shape: f32[2,4,256], index: 0, kind: input, shape index: {}]
  %s1 = inlined_call_operand.hbm [shape: f32[2,4,256], index: 1, kind: input, shape index: {}]
  %s2 = inlined_call_operand.hbm [shape: s32[2,4,4], index: 2, kind: output, shape index: {}]
  %s3 = sld [smem:[#allocation0]]
  $region57: #{tpu_custom_call.1} parent=0
    _
  %s5 = ssub.s32 1, %s3
  %s6 = scalar_select 0, %s5, %s3
  $region1: #{tpu_custom_call.1} parent=0
    #allocation5 [shape = 'u8[8192]{0}', space=vmem, size = 0x2000, scoped, tag = 'input window, operand 0']
    #allocation6 [shape = 's32[2]{0}', space=sflag, size = 0x8, scoped, tag = 'scoped memory for tpu_custom_call.1']
    #allocation7 [shape = 's32[2]{0}', space=sflag, size = 0x8, scoped, tag = 'scoped memory for tpu_custom_call.1']
    #allocation8 [shape = 'u8[8192]{0}', space=vmem, size = 0x2000, scoped, tag = 'input window, operand 1']
    #allocation9 [shape = 's32[2]{0}', space=sflag, size = 0x8, scoped, tag = 'scoped memory for tpu_custom_call.1']
    #allocation10 [shape = 'u8[4096]{0}', space=vmem, size = 0x1000, scoped, tag = 'output window, operand 0']
    %7 = vsyncpa [#allocation6], 0
    %s8 = scalar_lea.sflag [#allocation6], 1
    %9 = vsyncpa %s8, 0
    %10 = vsyncpa [#allocation9], 0
    %s11 = scalar_lea.sflag [#allocation9], 1
    %12 = vsyncpa %s11, 0
    %13 = vsyncpa [#allocation7], 0
    %s14 = scalar_lea.sflag [#allocation7], 1
    %15 = vsyncpa %s14, 0
    loop: start=0, step=1, limit=4
    $region2: #{tpu_custom_call.1} parent=1 // loop_pre_header
      _
    $region3: #{tpu_custom_call.1} parent=1 // loop_header
      %s17 = sphi 0, %s21
      %p18 = scmp.ge.s32.totalorder %s17, 4
      %s24 = sphi 0, %s36
      %s25 = sphi 0, %s32
      %s26 = sphi 0, %s24
      %s27 = sphi 0, %s25
      %s28 = sphi 0, %s26
      %s29 = sphi 0, %s27
      %s41 = sphi 0, %s43
      %s44 = sphi 0, %s41
      %s45 = sphi 0, %s44
      %s61 = sphi 0, %s45
      %s69 = sphi 0, %s71
      %s72 = sphi 0, %s69
      %s73 = sphi 0, %s72
      %s89 = sphi 0, %s73
      %s95 = sphi 0, %s97
      %s98 = sphi 0, %s95
      %s99 = sphi 0, %s98
      %s115 = sphi 0, %s99
    $region4: #{tpu_custom_call.1} parent=1 // loop_header_branch
      %20 = sbr.rel (%p18) target = $region8
    $region5: #{tpu_custom_call.1} parent=1 // loop_body
      %s22 = ssub.s32 %s17, 1
      %s23 = ssub.s32 %s17, 2
      %s30 = sadd.s32 1, %s25
      %p31 = scmp.ge.s32.totalorder %s30, 1
      %s32 = scalar_select %p31, 0, %s30
      %s33 = sadd.s32 1, %s24
      %s34 = scalar_select %p31, %s33, %s24
      %p35 = scmp.ge.s32.totalorder %s34, 2
      %s36 = scalar_select %p35, 0, %s34
      %s37 = ssub.s32 %s24, %s36
      %s38 = ssub.s32 %s25, %s32
      %s39 = sor.u32 %s37, %s38
      %p40 = scmp.eq.s32.totalorder %s39, 0
      %s42 = sadd.s32 %s41, 1
      %s43 = scalar_select %p40, %s41, %s42
      %p46 = pneg %p40
      %p47 = scmp.eq.s32.totalorder %s17, 1
      %p48 = por %p46, %p47
      %p49 = scmp.ne.s32.totalorder %s41, %s44
      %p50 = scmp.eq.s32.totalorder %s17, 0
      %p51 = por %p49, %p50
      %p52 = scmp.ne.s32.totalorder %s41, %s44
      %p53 = scmp.eq.s32.totalorder %s22, 1
      %p54 = por %p52, %p53
      %p55 = scmp.ne.s32.totalorder %s44, %s45
      %p56 = scmp.eq.s32.totalorder %s22, 0
      %p57 = por %p55, %p56
      %p58 = scmp.ne.s32.totalorder %s44, %s45
      %p59 = scmp.eq.s32.totalorder %s23, 1
      %p60 = por %p58, %p59
      %p62 = scmp.ne.s32.totalorder %s45, %s61
      %p63 = scmp.eq.s32.totalorder %s23, 0
      %p64 = por %p62, %p63
      %s65 = ssub.s32 %s24, %s36
      %s66 = ssub.s32 %s25, %s32
      %s67 = sor.u32 %s65, %s66
      %p68 = scmp.eq.s32.totalorder %s67, 0
      %s70 = sadd.s32 %s69, 1
      %s71 = scalar_select %p68, %s69, %s70
      %p74 = pneg %p68
      %p75 = scmp.eq.s32.totalorder %s17, 1
      %p76 = por %p74, %p75
      %p77 = scmp.ne.s32.totalorder %s69, %s72
      %p78 = scmp.eq.s32.totalorder %s17, 0
      %p79 = por %p77, %p78
      %p80 = scmp.ne.s32.totalorder %s69, %s72
      %p81 = scmp.eq.s32.totalorder %s22, 1
      %p82 = por %p80, %p81
      %p83 = scmp.ne.s32.totalorder %s72, %s73
      %p84 = scmp.eq.s32.totalorder %s22, 0
      %p85 = por %p83, %p84
      %p86 = scmp.ne.s32.totalorder %s72, %s73
      %p87 = scmp.eq.s32.totalorder %s23, 1
      %p88 = por %p86, %p87
      %p90 = scmp.ne.s32.totalorder %s73, %s89
      %p91 = scmp.eq.s32.totalorder %s23, 0
      %p92 = por %p90, %p91
      %s93 = ssub.s32 %s24, %s36
      %p94 = scmp.eq.s32.totalorder %s93, 0
      %s96 = sadd.s32 %s95, 1
      %s97 = scalar_select %p94, %s95, %s96
      %p100 = pneg %p94
      %p101 = scmp.eq.s32.totalorder %s17, 1
      %p102 = por %p100, %p101
      %p103 = scmp.ne.s32.totalorder %s95, %s98
      %p104 = scmp.eq.s32.totalorder %s17, 0
      %p105 = por %p103, %p104
      %p106 = scmp.ne.s32.totalorder %s95, %s98
      %p107 = scmp.eq.s32.totalorder %s22, 1
      %p108 = por %p106, %p107
      %p109 = scmp.ne.s32.totalorder %s98, %s99
      %p110 = scmp.eq.s32.totalorder %s22, 0
      %p111 = por %p109, %p110
      %p112 = scmp.ne.s32.totalorder %s98, %s99
      %p113 = scmp.eq.s32.totalorder %s23, 1
      %p114 = por %p112, %p113
      %p116 = scmp.ne.s32.totalorder %s99, %s115
      %p117 = scmp.eq.s32.totalorder %s23, 0
      %p118 = por %p116, %p117
      %p119 = scmp.le.s32.totalorder 1, %s17
      %p120 = scmp.lt.s32.totalorder %s17, 3
      %p121 = pnand %p119, %p120
      %p122 = pneg %p121
      // Predicated region
      $region9: #{tpu_custom_call.1} parent=5 // pred_check
        _
      $region10: #{tpu_custom_call.1} parent=5 // pred_check_branch
        %124 = sbr.rel (%p121) target = $region12
      $region11: #{tpu_custom_call.1} parent=5 // pred_region
        %s125 = ssub.s32 %s17, 1
      $region12: #{tpu_custom_call.1} parent=5 // pred_fallthru
        _
      %p126 = scmp.lt.s32.totalorder %s17, 2
      // Predicated region
      $region13: #{tpu_custom_call.1} parent=5 // pred_check
        %p127 = pneg %p126
      $region14: #{tpu_custom_call.1} parent=5 // pred_check_branch
        %129 = sbr.rel (%p127) target = $region16
      $region15: #{tpu_custom_call.1} parent=5 // pred_region
        // Predicated region
        $region17: #{tpu_custom_call.1} parent=15 // pred_check
          %p130 = pneg %p51
        $region18: #{tpu_custom_call.1} parent=15 // pred_check_branch
          %132 = sbr.rel (%p130) target = $region20
        $region19: #{tpu_custom_call.1} parent=15 // pred_region
          %s133 = sand.u32 %s41, 1
          %s134 = scalar_lea.sflag [#allocation6], %s133
          %s135 = sand.u32 %s41, 1
          %s136 = smul.addr %s135, 8
          %s137 = scalar_lea.vmem [#allocation5], %s136
          %s138 = smul.u32 2, %s25
          %140 = vsyncadd %s134, 0
          %s141 = smul.addr %s24, 2
          %s142 = sadd.s32 %s138, %s141
          %s143 = smul.addr %s142, 4
          %s144 = scalar_lea.hbm %s0, %s143
          %s146 = sshll.u32 %s144, 4
          %s147 = int_to_ptr.hbm [resolvable:$true] %s146
          %s148 = sshll.u32 %s137, 4
          %s149 = int_to_ptr.vmem [resolvable:$true] %s148
          %151 = dma.hbm_to_vmem [thread:$0]  %s147, 128, %s149, %s134
        $region20: #{tpu_custom_call.1} parent=15 // pred_fallthru
          _
        // Predicated region
        $region21: #{tpu_custom_call.1} parent=15 // pred_check
          %p152 = pneg %p79
        $region22: #{tpu_custom_call.1} parent=15 // pred_check_branch
          %154 = sbr.rel (%p152) target = $region24
        $region23: #{tpu_custom_call.1} parent=15 // pred_region
          %s155 = sand.u32 %s69, 1
          %s156 = scalar_lea.sflag [#allocation9], %s155
          %s157 = sand.u32 %s69, 1
          %s158 = smul.addr %s157, 8
          %s159 = scalar_lea.vmem [#allocation8], %s158
          %s160 = smul.u32 2, %s25
          %162 = vsyncadd %s156, 0
          %s163 = smul.addr %s24, 2
          %s164 = sadd.s32 %s160, %s163
          %s165 = smul.addr %s164, 4
          %s166 = scalar_lea.hbm %s1, %s165
          %s168 = sshll.u32 %s166, 4
          %s169 = int_to_ptr.hbm [resolvable:$true] %s168
          %s170 = sshll.u32 %s159, 4
          %s171 = int_to_ptr.vmem [resolvable:$true] %s170
          %173 = dma.hbm_to_vmem [thread:$0]  %s169, 128, %s171, %s156
        $region24: #{tpu_custom_call.1} parent=15 // pred_fallthru
          _
      $region16: #{tpu_custom_call.1} parent=5 // pred_fallthru
        _
      %p174 = scmp.le.s32.totalorder 1, %s17
      %p175 = scmp.lt.s32.totalorder %s17, 3
      %p176 = pnand %p174, %p175
      %p177 = pneg %p176
      // Predicated region
      $region25: #{tpu_custom_call.1} parent=5 // pred_check
        _
      $region26: #{tpu_custom_call.1} parent=5 // pred_check_branch
        %179 = sbr.rel (%p176) target = $region28
      $region27: #{tpu_custom_call.1} parent=5 // pred_region
        %s180 = ssub.s32 %s17, 1
        %s181 = sand.u32 %s44, 1
        %s182 = scalar_lea.sflag [#allocation6], %s181
        %s183 = sand.u32 %s44, 1
        %s184 = smul.addr %s183, 8
        %s185 = scalar_lea.vmem [#allocation5], %s184
        // Predicated region
        $region29: #{tpu_custom_call.1} parent=27 // pred_check
          %p186 = pneg %p57
        $region30: #{tpu_custom_call.1} parent=27 // pred_check_branch
          %188 = sbr.rel (%p186) target = $region32
        $region31: #{tpu_custom_call.1} parent=27 // pred_region
          %190 = dma.done %s182, 128
        $region32: #{tpu_custom_call.1} parent=27 // pred_fallthru
          _
        %s191 = sand.u32 %s72, 1
        %s192 = scalar_lea.sflag [#allocation9], %s191
        %s193 = sand.u32 %s72, 1
        %s194 = smul.addr %s193, 8
        %s195 = scalar_lea.vmem [#allocation8], %s194
        // Predicated region
        $region33: #{tpu_custom_call.1} parent=27 // pred_check
          %p196 = pneg %p85
        $region34: #{tpu_custom_call.1} parent=27 // pred_check_branch
          %198 = sbr.rel (%p196) target = $region36
        $region35: #{tpu_custom_call.1} parent=27 // pred_region
          %200 = dma.done %s192, 128
        $region36: #{tpu_custom_call.1} parent=27 // pred_fallthru
          _
        %s201 = sand.u32 %s44, 1
        %s202 = scalar_lea.sflag [#allocation6], %s201
        %s203 = sand.u32 %s44, 1
        %s204 = smul.addr %s203, 8
        %s205 = scalar_lea.vmem [#allocation5], %s204
        %p206 = pneg %p57
        %p207 = pneg %p54
        %s208 = sand.u32 %s72, 1
        %s209 = scalar_lea.sflag [#allocation9], %s208
        %s210 = sand.u32 %s72, 1
        %s211 = smul.addr %s210, 8
        %s212 = scalar_lea.vmem [#allocation8], %s211
        %p213 = pneg %p85
        %p214 = pneg %p82
        %p215 = pneg %p111
        %p216 = pneg %p108
        %s217 = sand.u32 %s98, 1
        %s218 = scalar_lea.sflag [#allocation7], %s217
        %s219 = sand.u32 %s98, 1
        %s220 = smul.addr %s219, 4
        %s221 = scalar_lea.vmem [#allocation10], %s220
        %s222 = smul.u32 2, %s27
        %s223 = smul.u32 2, %s27
        %p224 = scmp.eq.s32.totalorder %s27, 0
        // Predicated region
        $region37: #{tpu_custom_call.1} parent=27 // pred_check
          %p225 = pneg %p224
        $region38: #{tpu_custom_call.1} parent=27 // pred_check_branch
          %227 = sbr.rel (%p225) target = $region40
        $region39: #{tpu_custom_call.1} parent=27 // pred_region
          %228 = vst [vmem:[#allocation2] sm:$0xff] 0
          %229 = vst [vmem:[#allocation3] sm:$0xff] 0
          %230 = vst [vmem:[#allocation4] sm:$0xff] 0
        $region40: #{tpu_custom_call.1} parent=27 // pred_fallthru
          _
        %v231 = vld [vmem:[%s185] sm:$0xff]
        %v232 = vld [vmem:[%s195] sm:$0xff]
        %v233 = vlaneseq
        %v234 = vshrl.u32 %v233, 7
        %vm235 = vcmp.gt.f32.partialorder %v231, 0.5
        %v237 = vunpack.c.l.s4 839922192
        %v238 = vunpack.c.0.s8 %v237
        %v239 = vperm.slane %v234, %v238
        %v240 = vsel %vm235, %v239, 4
        %241 = vst [vmem:[#allocation1] ss:$2 sm:$0xff] %v240
        %v242 = vld.sshfl [vmem:[#allocation1] sm:$0xff pattern:$0x75316420]
        %v243 = vld.sshfl [vmem:[#allocation1 + $0x8] sm:$0xff pattern:$0x75316420]
        %vm244 = vcmask 1043456
        %v245 = vsel %vm244, %v242, 2147483647
        %v246 = vrot.slane %v245, 4
        %vm247 = vcmp.lt.s32.totalorder %v245, %v246
        %v248 = vsel %vm247, %v245, %v246
        %v249 = vrot.slane %v248, 2
        %vm250 = vcmp.lt.s32.totalorder %v248, %v249
        %v251 = vsel %vm250, %v248, %v249
        %v252 = vrot.slane %v251, 1
        %vm253 = vcmp.lt.s32.totalorder %v251, %v252
        %v254 = vsel %vm253, %v251, %v252
        %v255 = vsel %vm244, %v243, 2147483647
        %v256 = vrot.slane %v255, 4
        %vm257 = vcmp.lt.s32.totalorder %v255, %v256
        %v258 = vsel %vm257, %v255, %v256
        %v259 = vrot.slane %v258, 2
        %vm260 = vcmp.lt.s32.totalorder %v258, %v259
        %v261 = vsel %vm260, %v258, %v259
        %v262 = vrot.slane %v261, 1
        %vm263 = vcmp.lt.s32.totalorder %v261, %v262
        %v264 = vsel %vm263, %v261, %v262
        %vm265 = vcmp.eq.s32.totalorder %v254, 4
        %vm266 = vcmp.eq.s32.totalorder %v264, 4
        %v267 = vsel %vm265, 0, %v254
        %v268 = vsel %vm266, 0, %v264
        %270 = vst [vmem:[#allocation1] ss:$2 sm:$0xff] %v232
        %v271 = vld.sshfl [vmem:[#allocation1] sm:$0xff pattern:$0x75316420]
        %v272 = vld.sshfl [vmem:[#allocation1 + $0x8] sm:$0xff pattern:$0x75316420]
        %v275 = vsel %vm244, %v271, -inf
        %v276 = vrot.slane %v275, 4
        %v277 = vmax.f32 %v275, %v276
        %v278 = vrot.slane %v277, 2
        %v279 = vmax.f32 %v277, %v278
        %v280 = vrot.slane %v279, 1
        %v281 = vmax.f32 %v279, %v280
        %v282 = vsel %vm244, %v272, -inf
        %v283 = vrot.slane %v282, 4
        %v284 = vmax.f32 %v282, %v283
        %v285 = vrot.slane %v284, 2
        %v286 = vmax.f32 %v284, %v285
        %v287 = vrot.slane %v286, 1
        %v288 = vmax.f32 %v286, %v287
        %v291 = vrot.slane %v288, 4
        %v292 = vsel %vm244, %v281, %v291
        %vm294 = vcmp.eq.f32.partialorder %v232, %v292
        %v295 = vsel %vm294, %v239, 4
        %296 = vst [vmem:[#allocation1] ss:$2 sm:$0xff] %v295
        %v297 = vld.sshfl [vmem:[#allocation1] sm:$0xff pattern:$0x75316420]
        %v298 = vld.sshfl [vmem:[#allocation1 + $0x8] sm:$0xff pattern:$0x75316420]
        %v299 = vsel %vm244, %v297, 2147483647
        %v300 = vrot.slane %v299, 4
        %vm301 = vcmp.lt.s32.totalorder %v299, %v300
        %v302 = vsel %vm301, %v299, %v300
        %v303 = vrot.slane %v302, 2
        %vm304 = vcmp.lt.s32.totalorder %v302, %v303
        %v305 = vsel %vm304, %v302, %v303
        %v306 = vrot.slane %v305, 1
        %vm307 = vcmp.lt.s32.totalorder %v305, %v306
        %v308 = vsel %vm307, %v305, %v306
        %v309 = vsel %vm244, %v298, 2147483647
        %v310 = vrot.slane %v309, 4
        %vm311 = vcmp.lt.s32.totalorder %v309, %v310
        %v312 = vsel %vm311, %v309, %v310
        %v313 = vrot.slane %v312, 2
        %vm314 = vcmp.lt.s32.totalorder %v312, %v313
        %v315 = vsel %vm314, %v312, %v313
        %v316 = vrot.slane %v315, 1
        %vm317 = vcmp.lt.s32.totalorder %v315, %v316
        %v318 = vsel %vm317, %v315, %v316
        %vm319 = vcmp.eq.s32.totalorder %v267, %v234
        %vm320 = vcmp.eq.s32.totalorder %v268, %v234
        %vm321 = vcmp.eq.s32.totalorder %v308, %v234
        %vm322 = vcmp.eq.s32.totalorder %v318, %v234
        %v323 = vld [vmem:[#allocation2] sm:$0xff]
        %vm324 = vmand %vm319, %vm321
        %vm325 = vmand %vm320, %vm322
        %v326 = vsel %vm324, 1, 0
        %v327 = vsel %vm325, 1, 0
        %v328 = vrot.slane %v327, 4
        %v329 = vsel %vm244, %v326, %v328
        %v330 = vadd.s32 %v323, %v329
        %331 = vst [vmem:[#allocation2] sm:$0xff] %v330
        %v332 = vld [vmem:[#allocation3] sm:$0xff]
        %v333 = vsel %vm319, 1, 0
        %v334 = vsel %vm320, 1, 0
        %v335 = vrot.slane %v334, 4
        %v336 = vsel %vm244, %v333, %v335
        %v337 = vadd.s32 %v332, %v336
        %338 = vst [vmem:[#allocation3] sm:$0xff] %v337
        %v339 = vld [vmem:[#allocation4] sm:$0xff]
        %v340 = vsel %vm321, 1, 0
        %v341 = vsel %vm322, 1, 0
        %v342 = vrot.slane %v341, 4
        %v343 = vsel %vm244, %v340, %v342
        %v344 = vadd.s32 %v339, %v343
        %345 = vst [vmem:[#allocation4] sm:$0xff] %v344
        // Predicated region
        $region41: #{tpu_custom_call.1} parent=27 // pred_check
          %p346 = pneg %p224
        $region42: #{tpu_custom_call.1} parent=27 // pred_check_branch
          %348 = sbr.rel (%p346) target = $region44
        $region43: #{tpu_custom_call.1} parent=27 // pred_region
          %v349 = vld [vmem:[#allocation2] sm:$0xff]
          %350 = vst [vmem:[#allocation1] ss:$2 sm:$0xff] %v349
          %v351 = vld.sshfl [vmem:[#allocation1] sm:$0xff pattern:$0x75316420]
          %v352 = vld.sshfl [vmem:[#allocation1 + $0x8] sm:$0xff pattern:$0x75316420]
          %v353 = vsel %vm244, %v351, 0
          %v354 = vsel %vm244, %v352, 0
          %v355 = vadd.s32 %v353, %v354
          %v356 = vand.u32 %v355, 65535
          %v357 = vshrl.u32 %v355, 16
          %v358 = vcvt.s32.f32 %v356
          %v359 = vcvt.s32.f32 %v357
          %360 = vadd.xlane.f32.xlu0 %v358
          %v361 = vpop.xlane.xlu0 %360
          %362 = vadd.xlane.f32.xlu0 %v359
          %v363 = vpop.xlane.xlu0 %362
          %v364 = vcvt.f32.s32 %v361
          %v365 = vcvt.f32.s32 %v363
          %v366 = vshll.u32 %v365, 16
          %v367 = vadd.s32 %v366, %v364
          %v368 = vld [vmem:[#allocation3] sm:$0xff]
          %369 = vst [vmem:[#allocation1] ss:$2 sm:$0xff] %v368
          %v370 = vld.sshfl [vmem:[#allocation1] sm:$0xff pattern:$0x75316420]
          %v371 = vld.sshfl [vmem:[#allocation1 + $0x8] sm:$0xff pattern:$0x75316420]
          %v372 = vsel %vm244, %v370, 0
          %v373 = vsel %vm244, %v371, 0
          %v374 = vadd.s32 %v372, %v373
          %v375 = vand.u32 %v374, 65535
          %v376 = vshrl.u32 %v374, 16
          %v377 = vcvt.s32.f32 %v375
          %v378 = vcvt.s32.f32 %v376
          %379 = vadd.xlane.f32.xlu0 %v377
          %v380 = vpop.xlane.xlu0 %379
          %381 = vadd.xlane.f32.xlu0 %v378
          %v382 = vpop.xlane.xlu0 %381
          %v383 = vcvt.f32.s32 %v380
          %v384 = vcvt.f32.s32 %v382
          %v385 = vshll.u32 %v384, 16
          %v386 = vadd.s32 %v385, %v383
          %v387 = vld [vmem:[#allocation4] sm:$0xff]
          %388 = vst [vmem:[#allocation1] ss:$2 sm:$0xff] %v387
          %v389 = vld.sshfl [vmem:[#allocation1] sm:$0xff pattern:$0x75316420]
          %v390 = vld.sshfl [vmem:[#allocation1 + $0x8] sm:$0xff pattern:$0x75316420]
          %v391 = vsel %vm244, %v389, 0
          %v392 = vsel %vm244, %v390, 0
          %v393 = vadd.s32 %v391, %v392
          %v394 = vand.u32 %v393, 65535
          %v395 = vshrl.u32 %v393, 16
          %v396 = vcvt.s32.f32 %v394
          %v397 = vcvt.s32.f32 %v395
          %398 = vadd.xlane.f32.xlu0 %v396
          %v399 = vpop.xlane.xlu0 %398
          %400 = vadd.xlane.f32.xlu0 %v397
          %v401 = vpop.xlane.xlu0 %400
          %v402 = vcvt.f32.s32 %v399
          %v403 = vcvt.f32.s32 %v401
          %v404 = vshll.u32 %v403, 16
          %v405 = vadd.s32 %v404, %v402
          %v406 = vsub.s32 %v386, %v367
          %v407 = vsub.s32 %v405, %v367
          %v408 = vadd.s32 %v386, %v407
          %v409 = vsub.s32 256, %v408
          %v410 = vlaneseq
          %v411 = vand.u32 %v410, 127
          %vm412 = vcmp.eq.s32.totalorder %v411, 0
          %vm413 = vcmp.eq.s32.totalorder %v411, 1
          %vm414 = vcmp.eq.s32.totalorder %v411, 2
          %v415 = vsel %vm414, %v407, %v409
          %v416 = vsel %vm413, %v406, %v415
          %v417 = vsel %vm412, %v367, %v416
          %vm418 = vcmask 27648
          %419 = vst.msk [vmem:[%s221] sm:$0xf] %vm418, %v417
        $region44: #{tpu_custom_call.1} parent=27 // pred_fallthru
          _
        %s420 = sand.u32 %s98, 1
        %s421 = scalar_lea.sflag [#allocation7], %s420
        %s422 = sand.u32 %s98, 1
        %s423 = smul.addr %s422, 4
        %s424 = scalar_lea.vmem [#allocation10], %s423
        // Predicated region
        $region45: #{tpu_custom_call.1} parent=27 // pred_check
          %p425 = pneg %p108
        $region46: #{tpu_custom_call.1} parent=27 // pred_check_branch
          %427 = sbr.rel (%p425) target = $region48
        $region47: #{tpu_custom_call.1} parent=27 // pred_region
          %429 = vsyncadd %s421, 0
          %s430 = smul.addr %s26, 4
          %s431 = scalar_lea.hbm %s2, %s430
          %s433 = sshll.u32 %s424, 4
          %s434 = int_to_ptr.vmem [resolvable:$true] %s433
          %s435 = sshll.u32 %s431, 4
          %s436 = int_to_ptr.hbm [resolvable:$true] %s435
          %438 = dma.vmem_to_hbm [thread:$0]  %s434, 64, %s436, %s421
        $region48: #{tpu_custom_call.1} parent=27 // pred_fallthru
          _
      $region28: #{tpu_custom_call.1} parent=5 // pred_fallthru
        _
      %p439 = scmp.le.s32.totalorder 2, %s17
      // Predicated region
      $region49: #{tpu_custom_call.1} parent=5 // pred_check
        %p440 = pneg %p439
      $region50: #{tpu_custom_call.1} parent=5 // pred_check_branch
        %442 = sbr.rel (%p440) target = $region52
      $region51: #{tpu_custom_call.1} parent=5 // pred_region
        %s443 = ssub.s32 %s17, 2
        // Predicated region
        $region53: #{tpu_custom_call.1} parent=51 // pred_check
          %p444 = pneg %p114
        $region54: #{tpu_custom_call.1} parent=51 // pred_check_branch
          %446 = sbr.rel (%p444) target = $region56
        $region55: #{tpu_custom_call.1} parent=51 // pred_region
          %s447 = sand.u32 %s99, 1
          %s448 = scalar_lea.sflag [#allocation7], %s447
          %s449 = sand.u32 %s99, 1
          %s450 = smul.addr %s449, 4
          %s451 = scalar_lea.vmem [#allocation10], %s450
          %453 = dma.done %s448, 64
        $region56: #{tpu_custom_call.1} parent=51 // pred_fallthru
          _
      $region52: #{tpu_custom_call.1} parent=5 // pred_fallthru
        _
    $region6: #{tpu_custom_call.1} parent=1 // loop_footer
      %s21 = sadd.s32 1, %s17
    $region7: #{tpu_custom_call.1} parent=1 // loop_footer_branch
      %16 = sbr.rel target = $region3
    $region8: #{tpu_custom_call.1} parent=1 // loop_exit
      _
    %454 = vsyncpa [#allocation6], 1
    %s455 = scalar_lea.sflag [#allocation6], 1
    %456 = vsyncpa %s455, 1
    %457 = vsyncpa [#allocation9], 1
    %s458 = scalar_lea.sflag [#allocation9], 1
    %459 = vsyncpa %s458, 1
    %460 = vsyncpa [#allocation7], 1
    %s461 = scalar_lea.sflag [#allocation7], 1
    %462 = vsyncpa %s461, 1

</llo_original>
